<compile_context>
chip_gen: v5e
topology: v5e:2x2
jax: 0.10.0
libtpu: 0.0.40
codegen_flags: <defaults>
</compile_context>

<pallas_src>
import math

import jax
import jax.numpy as jnp
from jax import lax
from jax.experimental import pallas as pl
from jax.experimental.pallas import tpu as pltpu


def _round_up(x, m):
    return ((x + m - 1) // m) * m


def _tpu_generation():
    """Best-effort TPU generation sniffing (0 = unknown / non-TPU)."""
    try:
        kind = jax.devices()[0].device_kind.lower()
    except Exception:
        return 0
    if "v7" in kind or "tpu7" in kind:
        return 7
    if "v6" in kind:
        return 6
    if "v5" in kind:
        return 5
    return 0


def _choose_tiling(rows, max_tile_rows, min_grid_steps):
    """Pick (tile_rows, grid_steps, padded_rows) with bounded padding waste."""
    r8 = _round_up(max(rows, 1), 8)
    cap = _round_up(max(max_tile_rows, 8), 8)
    steps = max(-(-r8 // cap), max(min_grid_steps, 1))
    steps = max(min(steps, r8 // 8), 1)          # never below 8 rows per tile
    tile_rows = _round_up(-(-r8 // steps), 8)
    steps = -(-r8 // tile_rows)
    return tile_rows, steps, steps * tile_rows


def _split_f32_to_bf16_terms(x):
    """Exact (to ~1 f32 ulp) 3-term bf16 decomposition of an f32 array."""
    hi = x.astype(jnp.bfloat16)
    r1 = x - hi.astype(jnp.float32)
    lo = r1.astype(jnp.bfloat16)
    r2 = r1 - lo.astype(jnp.float32)
    lolo = r2.astype(jnp.bfloat16)
    return hi, lo, lolo


def _packed_embedding_kernel(tgt_ref, tables_ref, out_ref):
    # tgt_ref    : (TR, P)        int32  -- global targets p*V + idx, or -1
    # tables_ref : (3, P*V, P*D)  bf16   -- block-diag table split hi/lo/lolo
    # out_ref    : (TR, P*D)      f32    -- lane-dense packed embeddings
    tr, p_pack = tgt_ref.shape
    pv = tables_ref.shape[1]

    # One-hot: one full-width int compare per packed token, OR-accumulated as
    # bool, single cast to bf16 at the end (all offset/validity math was
    # hoisted to the wrapper).  Targets of different tokens live in disjoint
    # [p*V, (p+1)*V) lane ranges; -1 never matches.
    col = lax.broadcasted_iota(jnp.int32, (tr, pv), 1)
    hit = col == tgt_ref[:, 0:1]
    for q in range(1, p_pack):                    # tiny static unroll
        hit = hit | (col == tgt_ref[:, q:q + 1])
    one_hot = hit.astype(jnp.bfloat16)

    # bf16 x bf16 dots with f32 accumulation.  Exact for a one-hot LHS: each
    # output element is hi + lo + lolo of one table row, reconstructing the
    # original f32 value to ~1 ulp.
    acc = jnp.dot(one_hot, tables_ref[0], preferred_element_type=jnp.float32)
    acc = acc + jnp.dot(one_hot, tables_ref[1],
                        preferred_element_type=jnp.float32)
    acc = acc + jnp.dot(one_hot, tables_ref[2],
                        preferred_element_type=jnp.float32)
    out_ref[...] = acc


def char_embedding_lookup(word_sequence, emb_table, *, pack=None,
                          max_tile_rows=None, min_grid_steps=None):
    """word_sequence: (words, max_word_length) int; emb_table: (V, D) f32."""
    words, max_word_length = word_sequence.shape
    V, D = emb_table.shape

    gen = _tpu_generation()
    lane_width = 256 if gen in (6, 7) else 128    # match 256x256 MXU on v6e/v7x
    if max_tile_rows is None:
        max_tile_rows = 2048 if gen in (6, 7) else 1024
    if min_grid_steps is None:
        min_grid_steps = 2 if gen == 7 else 1     # keep both v7x TCs busy

    if pack is None:
        if D <= lane_width and lane_width % D == 0:
            pack = lane_width // D
        elif D <= 128 and 128 % D == 0:
            pack = 128 // D
        else:
            # TODO(synk): D not dividing 128 silently reverts to masked
            # partial stores and a skinny MXU N dimension.
            pack = 1
    P = max(int(pack), 1)

    N = words * max_word_length
    R = -(-N // P)                                # packed rows needed
    TR, steps, R_pad = _choose_tiling(R, max_tile_rows, min_grid_steps)
    N_pad = R_pad * P

    # --- index prep (tiny (R_pad, P) int32 work, done once in the wrapper) ---
    idx_flat = word_sequence.reshape(N).astype(jnp.int32)
    if N_pad != N:
        idx_flat = jnp.pad(idx_flat, (0, N_pad - N))   # pad with padding idx 0
    idx2d = idx_flat.reshape(R_pad, P)                 # lane-major indices
    offs = (jnp.arange(P, dtype=jnp.int32) * V)[None, :]
    valid = (idx2d >= 0) & (idx2d < V)
    targets = jnp.where(valid, idx2d + offs, -1)       # (R_pad, P) int32

    # --- block-diagonal table, split into exact bf16 hi/lo/lolo terms ---
    hi, lo, lolo = _split_f32_to_bf16_terms(emb_table.astype(jnp.float32))
    eye = jnp.eye(P, dtype=jnp.bfloat16)
    tables = jnp.stack([jnp.kron(eye, hi),
                        jnp.kron(eye, lo),
                        jnp.kron(eye, lolo)])          # (3, P*V, P*D) bf16

    PV, PD = P * V, P * D

    out_packed = pl.pallas_call(
        _packed_embedding_kernel,
        out_shape=jax.ShapeDtypeStruct((R_pad, PD), jnp.float32),
        grid_spec=pltpu.PrefetchScalarGridSpec(
            num_scalar_prefetch=0,
            grid=(steps,),
            in_specs=[
                # (TR, P) index tile: last dim equals the full array dim.
                pl.BlockSpec((TR, P), lambda i: (i, 0)),
                # Full split table; constant block index -> fetched once.
                pl.BlockSpec((3, PV, PD), lambda i: (0, 0, 0)),
            ],
            out_specs=pl.BlockSpec((TR, PD), lambda i: (i, 0)),
        ),
        compiler_params=pltpu.CompilerParams(
            dimension_semantics=("parallel",)),
    )(targets, tables)

    # Unpack: row r, lanes [p*D:(p+1)*D] hold the embedding of token r*P + p.
    out = out_packed.reshape(N_pad, D)
    if N_pad != N:                                 # only pay the copy if padded
        out = out[:N]
    return out.reshape(words, max_word_length, D)


def make_embedding_table(key, vocab_size, emb_dim):
    """Deterministic init mirroring the PyTorch module's __init__."""
    bound = math.sqrt(3.0 / emb_dim)
    w = jax.random.uniform(key, (vocab_size, emb_dim),
                           minval=-bound, maxval=bound, dtype=jnp.float32)
    w = w.at[0].set(0.0)       # padding_idx=0 row zeroed, as in the module
    return w


if __name__ == "__main__":
    key = jax.random.PRNGKey(0)
    k_emb, k_idx = jax.random.split(key)

    vocab_size = 32            # len(character_vocabulary)
    emb_dim = 32               # character_embedding_dimension
    words = 8
    max_word_length = 16       # max_word_length

    emb_table = make_embedding_table(k_emb, vocab_size, emb_dim)

    # Deterministic example input, including some padding (index 0) positions.
    word_sequence = jax.random.randint(
        k_idx, (words, max_word_length), minval=0, maxval=vocab_size,
        dtype=jnp.int32)

    out = char_embedding_lookup(word_sequence, emb_table)
    out = jax.block_until_ready(out)

    # Reference: plain gather (same semantics as nn.Embedding forward).
    ref = emb_table[word_sequence]
    assert out.shape == (words, max_word_length, emb_dim)
    assert jnp.allclose(out, ref, atol=1e-6), "mismatch vs reference gather"

    print("KERNEL_OK")
</pallas_src>

<mosaic_0001>
module attributes {stable_mosaic.version = 11 : i64} {
  func.func @_packed_embedding_kernel(%arg0: i32, %arg1: memref<32x4xi32, #tpu.memory_space<vmem>>, %arg2: memref<3x128x128xbf16, #tpu.memory_space<vmem>>, %arg3: memref<32x128xf32, #tpu.memory_space<vmem>>) attributes {dimension_semantics = [#tpu.dimension_semantics<parallel>], iteration_bounds = array<i64: 1>, scalar_prefetch = 0 : i64, scratch_operands = 0 : i64, tpu.core_type = #tpu.core_type<tc>, window_params = [{transform_indices = @transform_0, window_bounds = array<i64: 32, 4>}, {pipeline_mode = #tpu.pipeline_mode<synchronous>, transform_indices = @transform_1, window_bounds = array<i64: 3, 128, 128>}, {transform_indices = @transform_2, window_bounds = array<i64: 32, 128>}]} {
    %0 = tpu.iota {dimensions = array<i32: 1>} : vector<32x128xi32>
    %c0 = arith.constant 0 : index
    %c0_0 = arith.constant 0 : index
    %1 = vector.load %arg1[%c0, %c0_0] : memref<32x4xi32, #tpu.memory_space<vmem>>, vector<32x1xi32>
    %2 = vector.broadcast %1 : vector<32x1xi32> to vector<32x128xi32>
    %3 = arith.cmpi eq, %0, %2 : vector<32x128xi32>
    %c0_1 = arith.constant 0 : index
    %c1 = arith.constant 1 : index
    %4 = vector.load %arg1[%c0_1, %c1] : memref<32x4xi32, #tpu.memory_space<vmem>>, vector<32x1xi32>
    %5 = vector.broadcast %4 : vector<32x1xi32> to vector<32x128xi32>
    %6 = arith.cmpi eq, %0, %5 : vector<32x128xi32>
    %7 = arith.ori %3, %6 : vector<32x128xi1>
    %c0_2 = arith.constant 0 : index
    %c2 = arith.constant 2 : index
    %8 = vector.load %arg1[%c0_2, %c2] : memref<32x4xi32, #tpu.memory_space<vmem>>, vector<32x1xi32>
    %9 = vector.broadcast %8 : vector<32x1xi32> to vector<32x128xi32>
    %10 = arith.cmpi eq, %0, %9 : vector<32x128xi32>
    %11 = arith.ori %7, %10 : vector<32x128xi1>
    %c0_3 = arith.constant 0 : index
    %c3 = arith.constant 3 : index
    %12 = vector.load %arg1[%c0_3, %c3] : memref<32x4xi32, #tpu.memory_space<vmem>>, vector<32x1xi32>
    %13 = vector.broadcast %12 : vector<32x1xi32> to vector<32x128xi32>
    %14 = arith.cmpi eq, %0, %13 : vector<32x128xi32>
    %15 = arith.ori %11, %14 : vector<32x128xi1>
    %16 = arith.extui %15 : vector<32x128xi1> to vector<32x128xi32>
    %17 = arith.sitofp %16 : vector<32x128xi32> to vector<32x128xf32>
    %18 = arith.truncf %17 : vector<32x128xf32> to vector<32x128xbf16>
    %c0_4 = arith.constant 0 : index
    %c0_5 = arith.constant 0 : index
    %c0_6 = arith.constant 0 : index
    %19 = vector.load %arg2[%c0_4, %c0_5, %c0_6] : memref<3x128x128xbf16, #tpu.memory_space<vmem>>, vector<1x128x128xbf16>
    %20 = vector.shape_cast %19 : vector<1x128x128xbf16> to vector<128x128xbf16>
    %cst = arith.constant dense<0.000000e+00> : vector<32x128xf32>
    %21 = tpu.matmul %18, %20, %cst {dimension_numbers = #tpu.dot_dimension_numbers<[1], [0], [0], [1], [0, 0, 1, 1], [], []>} : vector<32x128xbf16>, vector<128x128xbf16>, vector<32x128xf32> -> vector<32x128xf32>
    %c1_7 = arith.constant 1 : index
    %c0_8 = arith.constant 0 : index
    %c0_9 = arith.constant 0 : index
    %22 = vector.load %arg2[%c1_7, %c0_8, %c0_9] : memref<3x128x128xbf16, #tpu.memory_space<vmem>>, vector<1x128x128xbf16>
    %23 = vector.shape_cast %22 : vector<1x128x128xbf16> to vector<128x128xbf16>
    %cst_10 = arith.constant dense<0.000000e+00> : vector<32x128xf32>
    %24 = tpu.matmul %18, %23, %cst_10 {dimension_numbers = #tpu.dot_dimension_numbers<[1], [0], [0], [1], [0, 0, 1, 1], [], []>} : vector<32x128xbf16>, vector<128x128xbf16>, vector<32x128xf32> -> vector<32x128xf32>
    %25 = arith.addf %21, %24 : vector<32x128xf32>
    %c2_11 = arith.constant 2 : index
    %c0_12 = arith.constant 0 : index
    %c0_13 = arith.constant 0 : index
    %26 = vector.load %arg2[%c2_11, %c0_12, %c0_13] : memref<3x128x128xbf16, #tpu.memory_space<vmem>>, vector<1x128x128xbf16>
    %27 = vector.shape_cast %26 : vector<1x128x128xbf16> to vector<128x128xbf16>
    %cst_14 = arith.constant dense<0.000000e+00> : vector<32x128xf32>
    %28 = tpu.matmul %18, %27, %cst_14 {dimension_numbers = #tpu.dot_dimension_numbers<[1], [0], [0], [1], [0, 0, 1, 1], [], []>} : vector<32x128xbf16>, vector<128x128xbf16>, vector<32x128xf32> -> vector<32x128xf32>
    %29 = arith.addf %25, %28 : vector<32x128xf32>
    %c0_15 = arith.constant 0 : index
    %c0_16 = arith.constant 0 : index
    %30 = vector.load %arg3[%c0_15, %c0_16] : memref<32x128xf32, #tpu.memory_space<vmem>>, vector<32x128xf32>
    tpu.vector_store %arg3[%c0_15, %c0_16], %29 {strides = array<i32>} : memref<32x128xf32, #tpu.memory_space<vmem>>, vector<32x128xf32>,
    return
  }
  func.func @transform_0(%arg0: i32) -> (i32, i32) {
    %c0_i32 = arith.constant 0 : i32
    %c0_i32_0 = arith.constant 0 : i32
    return %arg0, %c0_i32 : i32, i32
  }
  func.func @transform_1(%arg0: i32) -> (i32, i32, i32) {
    %c0_i32 = arith.constant 0 : i32
    %c0_i32_0 = arith.constant 0 : i32
    %c0_i32_1 = arith.constant 0 : i32
    %c0_i32_2 = arith.constant 0 : i32
    return %c0_i32, %c0_i32_0, %c0_i32_1 : i32, i32, i32
  }
  func.func @transform_2(%arg0: i32) -> (i32, i32) {
    %c0_i32 = arith.constant 0 : i32
    %c0_i32_0 = arith.constant 0 : i32
    return %arg0, %c0_i32 : i32, i32
  }
}

</mosaic_0001>

<llo_original>
// kernel: tpu_custom_call.1
$region0: #{tpu_custom_call.1}
  #allocation0 [shape = 'u32[]', space=smem, size = 0x4, offset = 0x4, fixed_abs, tag = 'smem constant byte address 0x4 - core index']
  #allocation1 [shape = 'u32[72,128]{1,0:T(1,128)}', space=vmem, size = 0x9000, scoped, tag = 'internal scratch']
  %s0 = inlined_call_operand.vmem [shape: s32[32,4], index: 0, kind: input, shape index: {}]
  %s1 = inlined_call_operand.hbm [shape: bf16[3,128,128], index: 1, kind: input, shape index: {}]
  %s2 = inlined_call_operand.hbm [shape: f32[32,128], index: 2, kind: output, shape index: {}]
  %s3 = sld [smem:[#allocation0]]
  $region22: #{tpu_custom_call.1} parent=0
    _
  %s5 = ssub.s32 1, %s3
  %s6 = scalar_select 0, %s5, %s3
  $region1: #{tpu_custom_call.1} parent=0
    #allocation2 [shape = 'u8[98304]{0}', space=vmem, size = 0x18000, scoped, tag = 'input window, operand 1, single buffered']
    #allocation3 [shape = 's32[1]{0}', space=sflag, size = 0x4, scoped, tag = 'scoped memory for tpu_custom_call.1']
    #allocation4 [shape = 's32[1]{0}', space=sflag, size = 0x4, scoped, tag = 'scoped memory for tpu_custom_call.1']
    #allocation5 [shape = 'u8[16384]{0}', space=vmem, size = 0x4000, scoped, tag = 'output window, operand 0, single buffered']
    %7 = vsyncpa [#allocation3], 0
    %8 = vsyncpa [#allocation4], 0
    // Predicated region
    $region2: #{tpu_custom_call.1} parent=1 // pred_check
      _
    $region3: #{tpu_custom_call.1} parent=1 // pred_check_branch
      %10 = sbr.rel (0) target = $region5
    $region4: #{tpu_custom_call.1} parent=1 // pred_region
      _
    $region5: #{tpu_custom_call.1} parent=1 // pred_fallthru
      _
    // Predicated region
    $region6: #{tpu_custom_call.1} parent=1 // pred_check
      _
    $region7: #{tpu_custom_call.1} parent=1 // pred_check_branch
      %12 = sbr.rel (0) target = $region9
    $region8: #{tpu_custom_call.1} parent=1 // pred_region
      %14 = vsyncadd [#allocation3], 0
      %s15 = sshll.u32 %s1, 4
      %s16 = int_to_ptr.hbm [resolvable:$true] %s15
      %s17 = sshll.u32 [#allocation2], 4
      %s18 = int_to_ptr.vmem [resolvable:$true] %s17
      %23 = dma.hbm_to_vmem [thread:$0]  %s16, 3072, %s18, [#allocation3], 64, 64, 4
    $region9: #{tpu_custom_call.1} parent=1 // pred_fallthru
      _
    // Predicated region
    $region10: #{tpu_custom_call.1} parent=1 // pred_check
      _
    $region11: #{tpu_custom_call.1} parent=1 // pred_check_branch
      %25 = sbr.rel (0) target = $region13
    $region12: #{tpu_custom_call.1} parent=1 // pred_region
      %27 = dma.done [#allocation3], 3072
    $region13: #{tpu_custom_call.1} parent=1 // pred_fallthru
      _
    %v28 = vlaneseq
    %v29 = vand.u32 %v28, 127
    %v30 = vld [vmem:[%s0] sm:$0xff]
    %v31 = vld [vmem:[%s0 + $0x8] sm:$0xff]
    %v32 = vld [vmem:[%s0 + $0x10] sm:$0xff]
    %v33 = vld [vmem:[%s0 + $0x18] sm:$0xff]
    %34 = vset.pattern.permute.xlu0 0
    %35 = vperm.xlu0 %34, %v30
    %v36 = vpop.permute.xlu0 %35
    %37 = vset.pattern.permute.xlu0 0
    %38 = vperm.xlu0 %37, %v31
    %v39 = vpop.permute.xlu0 %38
    %40 = vset.pattern.permute.xlu0 0
    %41 = vperm.xlu0 %40, %v32
    %v42 = vpop.permute.xlu0 %41
    %43 = vset.pattern.permute.xlu0 0
    %44 = vperm.xlu0 %43, %v33
    %v45 = vpop.permute.xlu0 %44
    %vm46 = vcmp.eq.s32.totalorder %v29, %v36
    %vm47 = vcmp.eq.s32.totalorder %v29, %v39
    %vm48 = vcmp.eq.s32.totalorder %v29, %v42
    %vm49 = vcmp.eq.s32.totalorder %v29, %v45
    %50 = vset.pattern.permute.xlu0 1
    %51 = vperm.xlu0 %50, %v30
    %v52 = vpop.permute.xlu0 %51
    %53 = vset.pattern.permute.xlu0 1
    %54 = vperm.xlu0 %53, %v31
    %v55 = vpop.permute.xlu0 %54
    %56 = vset.pattern.permute.xlu0 1
    %57 = vperm.xlu0 %56, %v32
    %v58 = vpop.permute.xlu0 %57
    %59 = vset.pattern.permute.xlu0 1
    %60 = vperm.xlu0 %59, %v33
    %v61 = vpop.permute.xlu0 %60
    %vm62 = vcmp.eq.s32.totalorder %v29, %v52
    %vm63 = vcmp.eq.s32.totalorder %v29, %v55
    %vm64 = vcmp.eq.s32.totalorder %v29, %v58
    %vm65 = vcmp.eq.s32.totalorder %v29, %v61
    %vm66 = vmor %vm46, %vm62
    %vm67 = vmor %vm47, %vm63
    %vm68 = vmor %vm48, %vm64
    %vm69 = vmor %vm49, %vm65
    %70 = vset.pattern.permute.xlu0 2
    %71 = vperm.xlu0 %70, %v30
    %v72 = vpop.permute.xlu0 %71
    %73 = vset.pattern.permute.xlu0 2
    %74 = vperm.xlu0 %73, %v31
    %v75 = vpop.permute.xlu0 %74
    %76 = vset.pattern.permute.xlu0 2
    %77 = vperm.xlu0 %76, %v32
    %v78 = vpop.permute.xlu0 %77
    %79 = vset.pattern.permute.xlu0 2
    %80 = vperm.xlu0 %79, %v33
    %v81 = vpop.permute.xlu0 %80
    %vm82 = vcmp.eq.s32.totalorder %v29, %v72
    %vm83 = vcmp.eq.s32.totalorder %v29, %v75
    %vm84 = vcmp.eq.s32.totalorder %v29, %v78
    %vm85 = vcmp.eq.s32.totalorder %v29, %v81
    %vm86 = vmor %vm66, %vm82
    %vm87 = vmor %vm67, %vm83
    %vm88 = vmor %vm68, %vm84
    %vm89 = vmor %vm69, %vm85
    %90 = vset.pattern.permute.xlu0 3
    %91 = vperm.xlu0 %90, %v30
    %v92 = vpop.permute.xlu0 %91
    %93 = vset.pattern.permute.xlu0 3
    %94 = vperm.xlu0 %93, %v31
    %v95 = vpop.permute.xlu0 %94
    %96 = vset.pattern.permute.xlu0 3
    %97 = vperm.xlu0 %96, %v32
    %v98 = vpop.permute.xlu0 %97
    %99 = vset.pattern.permute.xlu0 3
    %100 = vperm.xlu0 %99, %v33
    %v101 = vpop.permute.xlu0 %100
    %vm102 = vcmp.eq.s32.totalorder %v29, %v92
    %vm103 = vcmp.eq.s32.totalorder %v29, %v95
    %vm104 = vcmp.eq.s32.totalorder %v29, %v98
    %vm105 = vcmp.eq.s32.totalorder %v29, %v101
    %vm106 = vmor %vm86, %vm102
    %vm107 = vmor %vm87, %vm103
    %vm108 = vmor %vm88, %vm104
    %vm109 = vmor %vm89, %vm105
    %v110 = vsel %vm106, 1, 0
    %v111 = vsel %vm107, 1, 0
    %v112 = vsel %vm108, 1, 0
    %v113 = vsel %vm109, 1, 0
    %v114 = vcvt.s32.f32 %v110
    %v115 = vcvt.s32.f32 %v111
    %v116 = vcvt.s32.f32 %v112
    %v117 = vcvt.s32.f32 %v113
    %v118 = vpack.c.bf16 %v115, %v114
    %v119 = vpack.c.bf16 %v117, %v116
    %v120 = vld [vmem:[#allocation2] sm:$0xf]
    %v121 = vld [vmem:[#allocation2 + $0x4] sm:$0xf]
    %v122 = vld [vmem:[#allocation2 + $0x8] sm:$0xf]
    %v123 = vld [vmem:[#allocation2 + $0xc] sm:$0xf]
    %v124 = vld [vmem:[#allocation2 + $0x10] sm:$0xf]
    %v125 = vld [vmem:[#allocation2 + $0x14] sm:$0xf]
    %v126 = vld [vmem:[#allocation2 + $0x18] sm:$0xf]
    %v127 = vld [vmem:[#allocation2 + $0x1c] sm:$0xf]
    %v128 = vld [vmem:[#allocation2 + $0x20] sm:$0xf]
    %v129 = vld [vmem:[#allocation2 + $0x24] sm:$0xf]
    %v130 = vld [vmem:[#allocation2 + $0x28] sm:$0xf]
    %v131 = vld [vmem:[#allocation2 + $0x2c] sm:$0xf]
    %v132 = vld [vmem:[#allocation2 + $0x30] sm:$0xf]
    %v133 = vld [vmem:[#allocation2 + $0x34] sm:$0xf]
    %v134 = vld [vmem:[#allocation2 + $0x38] sm:$0xf]
    %v135 = vld [vmem:[#allocation2 + $0x3c] sm:$0xf]
    %s136 = scalar_lea.vmem [#allocation2], 64
    %v137 = vld [vmem:[%s136] sm:$0xf]
    %v138 = vld [vmem:[%s136 + $0x4] sm:$0xf]
    %v139 = vld [vmem:[%s136 + $0x8] sm:$0xf]
    %v140 = vld [vmem:[%s136 + $0xc] sm:$0xf]
    %v141 = vld [vmem:[%s136 + $0x10] sm:$0xf]
    %v142 = vld [vmem:[%s136 + $0x14] sm:$0xf]
    %v143 = vld [vmem:[%s136 + $0x18] sm:$0xf]
    %v144 = vld [vmem:[%s136 + $0x1c] sm:$0xf]
    %v145 = vld [vmem:[%s136 + $0x20] sm:$0xf]
    %v146 = vld [vmem:[%s136 + $0x24] sm:$0xf]
    %v147 = vld [vmem:[%s136 + $0x28] sm:$0xf]
    %v148 = vld [vmem:[%s136 + $0x2c] sm:$0xf]
    %v149 = vld [vmem:[%s136 + $0x30] sm:$0xf]
    %v150 = vld [vmem:[%s136 + $0x34] sm:$0xf]
    %v151 = vld [vmem:[%s136 + $0x38] sm:$0xf]
    %v152 = vld [vmem:[%s136 + $0x3c] sm:$0xf]
    %v169 = vunpack.c.l.b16 %v137
    %v170 = vunpack.c.l.b16 %v138
    %v171 = vunpack.c.l.b16 %v139
    %v172 = vunpack.c.l.b16 %v140
    %v173 = vunpack.c.l.b16 %v141
    %v174 = vunpack.c.l.b16 %v142
    %v175 = vunpack.c.l.b16 %v143
    %v176 = vunpack.c.l.b16 %v144
    %v177 = vunpack.c.l.b16 %v145
    %v178 = vunpack.c.l.b16 %v146
    %v179 = vunpack.c.l.b16 %v147
    %v180 = vunpack.c.l.b16 %v148
    %v181 = vunpack.c.l.b16 %v149
    %v182 = vunpack.c.l.b16 %v150
    %v183 = vunpack.c.l.b16 %v151
    %v184 = vunpack.c.l.b16 %v152
    %v185 = vpack.c.b16 %v170, %v169
    %v186 = vpack.c.b16 %v172, %v171
    %v187 = vpack.c.b16 %v174, %v173
    %v188 = vpack.c.b16 %v176, %v175
    %v189 = vpack.c.b16 %v178, %v177
    %v190 = vpack.c.b16 %v180, %v179
    %v191 = vpack.c.b16 %v182, %v181
    %v192 = vpack.c.b16 %v184, %v183
    %201 = vmatpush.bf16.msra.mxu0 %v192
    %202 = vmatpush.bf16.msra.mxu0 %v191
    %203 = vmatpush.bf16.msra.mxu0 %v190
    %204 = vmatpush.bf16.msra.mxu0 %v189
    %205 = vmatpush.bf16.msra.mxu0 %v188
    %206 = vmatpush.bf16.msra.mxu0 %v187
    %207 = vmatpush.bf16.msra.mxu0 %v186
    %208 = vmatpush.bf16.msra.mxu0 %v185
    %209 = vmatmul.bf16.gmra.mxu0 %v118
    %v210 = vpop.f32.mrf.mxu0
    %v211 = vadd.f32 0.0, %v210
    %v212 = vpop.f32.mrf.mxu0
    %v213 = vadd.f32 0.0, %v212
    %214 = vmatmul.bf16.gmra.mxu0 %v119
    %v215 = vpop.f32.mrf.mxu0
    %v216 = vadd.f32 0.0, %v215
    %v217 = vpop.f32.mrf.mxu0
    %v218 = vadd.f32 0.0, %v217
    %219 = vdwg.mxu0
    %v236 = vunpack.c.l.b16 %v120
    %v237 = vunpack.c.l.b16 %v121
    %v238 = vunpack.c.l.b16 %v122
    %v239 = vunpack.c.l.b16 %v123
    %v240 = vunpack.c.l.b16 %v124
    %v241 = vunpack.c.l.b16 %v125
    %v242 = vunpack.c.l.b16 %v126
    %v243 = vunpack.c.l.b16 %v127
    %v244 = vunpack.c.l.b16 %v128
    %v245 = vunpack.c.l.b16 %v129
    %v246 = vunpack.c.l.b16 %v130
    %v247 = vunpack.c.l.b16 %v131
    %v248 = vunpack.c.l.b16 %v132
    %v249 = vunpack.c.l.b16 %v133
    %v250 = vunpack.c.l.b16 %v134
    %v251 = vunpack.c.l.b16 %v135
    %v252 = vpack.c.b16 %v237, %v236
    %v253 = vpack.c.b16 %v239, %v238
    %v254 = vpack.c.b16 %v241, %v240
    %v255 = vpack.c.b16 %v243, %v242
    %v256 = vpack.c.b16 %v245, %v244
    %v257 = vpack.c.b16 %v247, %v246
    %v258 = vpack.c.b16 %v249, %v248
    %v259 = vpack.c.b16 %v251, %v250
    %268 = vmatpush.bf16.msra.mxu0 %v259
    %269 = vmatpush.bf16.msra.mxu0 %v258
    %270 = vmatpush.bf16.msra.mxu0 %v257
    %271 = vmatpush.bf16.msra.mxu0 %v256
    %272 = vmatpush.bf16.msra.mxu0 %v255
    %273 = vmatpush.bf16.msra.mxu0 %v254
    %274 = vmatpush.bf16.msra.mxu0 %v253
    %275 = vmatpush.bf16.msra.mxu0 %v252
    %276 = vmatmul.bf16.gmra.mxu0 %v118
    %v277 = vpop.f32.mrf.mxu0
    %v278 = vadd.f32 %v211, %v277
    %v279 = vpop.f32.mrf.mxu0
    %v280 = vadd.f32 %v213, %v279
    %281 = vmatmul.bf16.gmra.mxu0 %v119
    %v282 = vpop.f32.mrf.mxu0
    %v283 = vadd.f32 %v216, %v282
    %v284 = vpop.f32.mrf.mxu0
    %v285 = vadd.f32 %v218, %v284
    %286 = vdwg.mxu0
    %s287 = scalar_lea.vmem [#allocation2], 128
    %v288 = vld [vmem:[%s287] sm:$0xf]
    %v289 = vld [vmem:[%s287 + $0x4] sm:$0xf]
    %v290 = vld [vmem:[%s287 + $0x8] sm:$0xf]
    %v291 = vld [vmem:[%s287 + $0xc] sm:$0xf]
    %v292 = vld [vmem:[%s287 + $0x10] sm:$0xf]
    %v293 = vld [vmem:[%s287 + $0x14] sm:$0xf]
    %v294 = vld [vmem:[%s287 + $0x18] sm:$0xf]
    %v295 = vld [vmem:[%s287 + $0x1c] sm:$0xf]
    %v296 = vld [vmem:[%s287 + $0x20] sm:$0xf]
    %v297 = vld [vmem:[%s287 + $0x24] sm:$0xf]
    %v298 = vld [vmem:[%s287 + $0x28] sm:$0xf]
    %v299 = vld [vmem:[%s287 + $0x2c] sm:$0xf]
    %v300 = vld [vmem:[%s287 + $0x30] sm:$0xf]
    %v301 = vld [vmem:[%s287 + $0x34] sm:$0xf]
    %v302 = vld [vmem:[%s287 + $0x38] sm:$0xf]
    %v303 = vld [vmem:[%s287 + $0x3c] sm:$0xf]
    %v320 = vunpack.c.l.b16 %v288
    %v321 = vunpack.c.l.b16 %v289
    %v322 = vunpack.c.l.b16 %v290
    %v323 = vunpack.c.l.b16 %v291
    %v324 = vunpack.c.l.b16 %v292
    %v325 = vunpack.c.l.b16 %v293
    %v326 = vunpack.c.l.b16 %v294
    %v327 = vunpack.c.l.b16 %v295
    %v328 = vunpack.c.l.b16 %v296
    %v329 = vunpack.c.l.b16 %v297
    %v330 = vunpack.c.l.b16 %v298
    %v331 = vunpack.c.l.b16 %v299
    %v332 = vunpack.c.l.b16 %v300
    %v333 = vunpack.c.l.b16 %v301
    %v334 = vunpack.c.l.b16 %v302
    %v335 = vunpack.c.l.b16 %v303
    %v336 = vpack.c.b16 %v321, %v320
    %v337 = vpack.c.b16 %v323, %v322
    %v338 = vpack.c.b16 %v325, %v324
    %v339 = vpack.c.b16 %v327, %v326
    %v340 = vpack.c.b16 %v329, %v328
    %v341 = vpack.c.b16 %v331, %v330
    %v342 = vpack.c.b16 %v333, %v332
    %v343 = vpack.c.b16 %v335, %v334
    %352 = vmatpush.bf16.msra.mxu0 %v343
    %353 = vmatpush.bf16.msra.mxu0 %v342
    %354 = vmatpush.bf16.msra.mxu0 %v341
    %355 = vmatpush.bf16.msra.mxu0 %v340
    %356 = vmatpush.bf16.msra.mxu0 %v339
    %357 = vmatpush.bf16.msra.mxu0 %v338
    %358 = vmatpush.bf16.msra.mxu0 %v337
    %359 = vmatpush.bf16.msra.mxu0 %v336
    %360 = vmatmul.bf16.gmra.mxu0 %v118
    %v361 = vpop.f32.mrf.mxu0
    %v362 = vadd.f32 0.0, %v361
    %v363 = vpop.f32.mrf.mxu0
    %v364 = vadd.f32 0.0, %v363
    %365 = vmatmul.bf16.gmra.mxu0 %v119
    %v366 = vpop.f32.mrf.mxu0
    %v367 = vadd.f32 0.0, %v366
    %v368 = vpop.f32.mrf.mxu0
    %v369 = vadd.f32 0.0, %v368
    %370 = vdwg.mxu0
    %v371 = vadd.f32 %v278, %v362
    %v372 = vadd.f32 %v280, %v364
    %v373 = vadd.f32 %v283, %v367
    %v374 = vadd.f32 %v285, %v369
    %375 = vst [vmem:[#allocation5] sm:$0xff] %v371
    %376 = vst [vmem:[#allocation5 + $0x8] sm:$0xff] %v372
    %377 = vst [vmem:[#allocation5 + $0x10] sm:$0xff] %v373
    %378 = vst [vmem:[#allocation5 + $0x18] sm:$0xff] %v374
    // Predicated region
    $region14: #{tpu_custom_call.1} parent=1 // pred_check
      _
    $region15: #{tpu_custom_call.1} parent=1 // pred_check_branch
      %380 = sbr.rel (0) target = $region17
    $region16: #{tpu_custom_call.1} parent=1 // pred_region
      %382 = vsyncadd [#allocation4], 0
      %s383 = sshll.u32 [#allocation5], 4
      %s384 = int_to_ptr.vmem [resolvable:$true] %s383
      %s385 = sshll.u32 %s2, 4
      %s386 = int_to_ptr.hbm [resolvable:$true] %s385
      %391 = dma.vmem_to_hbm [thread:$0]  %s384, 512, %s386, [#allocation4], 128, 128, 8
    $region17: #{tpu_custom_call.1} parent=1 // pred_fallthru
      _
    // Predicated region
    $region18: #{tpu_custom_call.1} parent=1 // pred_check
      _
    $region19: #{tpu_custom_call.1} parent=1 // pred_check_branch
      %393 = sbr.rel (0) target = $region21
    $region20: #{tpu_custom_call.1} parent=1 // pred_region
      %395 = dma.done [#allocation4], 512
    $region21: #{tpu_custom_call.1} parent=1 // pred_fallthru
      _
    %396 = vsyncpa [#allocation3], 1
    %397 = vsyncpa [#allocation4], 1

</llo_original>
